<compile_context>
chip_gen: v5e
topology: v5e:2x2
jax: 0.10.0
libtpu: 0.0.40
codegen_flags: <defaults>
</compile_context>

<pallas_src>
import math

import jax
import jax.numpy as jnp
from jax.experimental import pallas as pl
from jax.experimental.pallas import tpu as pltpu


def _round_up(x, m):
    return ((x + m - 1) // m) * m


def stl_attn_kernel(x_ref, a_ref, v_ref, out_ref):
    # x_ref   [TILE_N, d_q]  batch rows (gridded, pipelined)
    # a_ref   [d_q, T_k]     fused (Wq^T K^T)/sqrt(E), resident across grid
    # v_ref   [T_k, E]       value projection of the style tokens, resident
    # out_ref [TILE_N, E]
    scores = jnp.dot(x_ref[...], a_ref[...], preferred_element_type=jnp.float32)

    # softmax over tokens (last axis), numerically stabilized
    scores = scores - jnp.max(scores, axis=-1, keepdims=True)
    p = jnp.exp(scores)
    denom = jnp.sum(p, axis=-1, keepdims=True)

    # EUP approximate reciprocal + one Newton-Raphson step: full f32 accuracy,
    # no VALU divide in the hot loop.
    r = pl.reciprocal(denom, approx=True)
    r = r * (2.0 - denom * r)
    p = p * r

    out_ref[...] = jnp.dot(p, v_ref[...], preferred_element_type=jnp.float32)


@jax.jit
def stl_forward(x, embed, wq, wk, wv):
    """x: [N, d_q]; embed: [T_k, E]; wq: [E, d_q]; wk, wv: [E, E] (torch layout).
    Returns [N, 1, E], matching the torch STL output (bias=False Linears)."""
    N, d_q = x.shape
    T_k, E = embed.shape

    # ---- batch-independent precompute (tiny, constant-folds/fuses under jit) ----
    f32 = jnp.float32
    keys_soft = jnp.tanh(embed.astype(f32))                    # [T_k, E]
    k = keys_soft @ wk.astype(f32).T                           # [T_k, E]
    v = keys_soft @ wv.astype(f32).T                           # [T_k, E]
    a = (wq.astype(f32).T @ k.T) * (1.0 / math.sqrt(E))        # [d_q, T_k], scale folded in

    # ---- batch tiling: TILE_N multiple of 8 (f32 sublane); pad ragged tail ----
    tile_n = min(512, _round_up(N, 8))
    n_pad = _round_up(N, tile_n)
    x_f = x.astype(f32)
    if n_pad != N:
        x_f = jnp.pad(x_f, ((0, n_pad - N), (0, 0)))

    out = pl.pallas_call(
        stl_attn_kernel,
        out_shape=jax.ShapeDtypeStruct((n_pad, E), jnp.float32),
        grid_spec=pltpu.PrefetchScalarGridSpec(
            num_scalar_prefetch=0,
            grid=(n_pad // tile_n,),
            in_specs=[
                pl.BlockSpec((tile_n, d_q), lambda i: (i, 0)),   # x: streamed per tile
                pl.BlockSpec((d_q, T_k), lambda i: (0, 0)),      # A: resident
                pl.BlockSpec((T_k, E), lambda i: (0, 0)),        # V: resident
            ],
            out_specs=pl.BlockSpec((tile_n, E), lambda i: (i, 0)),
        ),
        compiler_params=pltpu.CompilerParams(
            dimension_semantics=("parallel",)),                  # megacore sharding on v7x
    )(x_f, a, v)

    return out[:N, None, :]


def stl_reference(x, embed, wq, wk, wv):
    """Pure-JAX reference of the PyTorch forward (num_heads=1, bias=False)."""
    keys_soft = jnp.tanh(embed)                     # [T_k, E]
    q = x @ wq.T                                    # [N, E]
    k = keys_soft @ wk.T                            # [T_k, E]
    v = keys_soft @ wv.T                            # [T_k, E]
    E = embed.shape[1]
    scores = (q @ k.T) / (E ** 0.5)                 # [N, T_k]
    scores = jax.nn.softmax(scores, axis=-1)
    out = scores @ v                                # [N, E]
    return out[:, None, :]


if __name__ == "__main__":
    # Small config consistent with the module:
    #   encoder_hidden E = 32, token_num = 8, batch N = 2, query_dim = E // 2
    N = 2
    E = 32
    token_num = 8
    d_q = E // 2

    key = jax.random.PRNGKey(0)
    k_emb, k_x, k_wq, k_wk, k_wv = jax.random.split(key, 5)

    # embed ~ Normal(0, 0.5) as in torch.nn.init.normal_(std=0.5)
    embed = 0.5 * jax.random.normal(k_emb, (token_num, E), dtype=jnp.float32)
    x = jax.random.normal(k_x, (N, d_q), dtype=jnp.float32)

    # Linear weights (torch shape convention: [out_features, in_features]),
    # deterministic uniform init ~ U(-1/sqrt(in), 1/sqrt(in)); module uses bias=False.
    def lin_init(k, out_f, in_f):
        bound = 1.0 / math.sqrt(in_f)
        return jax.random.uniform(k, (out_f, in_f), dtype=jnp.float32,
                                  minval=-bound, maxval=bound)

    wq = lin_init(k_wq, E, d_q)   # W_query
    wk = lin_init(k_wk, E, E)     # W_key
    wv = lin_init(k_wv, E, E)     # W_value

    out = stl_forward(x, embed, wq, wk, wv)
    out = jax.block_until_ready(out)

    ref = stl_reference(x, embed, wq, wk, wv)
    assert out.shape == (N, 1, E), out.shape
    err = float(jnp.max(jnp.abs(out - ref)))
    assert jnp.allclose(out, ref, atol=1e-4, rtol=1e-4), f"mismatch vs reference, max err={err}"

    print("KERNEL_OK")
</pallas_src>

<mosaic_0001>
module attributes {stable_mosaic.version = 11 : i64} {
  func.func @stl_attn_kernel(%arg0: i32, %arg1: memref<8x16xf32, #tpu.memory_space<vmem>>, %arg2: memref<16x8xf32, #tpu.memory_space<vmem>>, %arg3: memref<8x32xf32, #tpu.memory_space<vmem>>, %arg4: memref<8x32xf32, #tpu.memory_space<vmem>>) attributes {dimension_semantics = [#tpu.dimension_semantics<parallel>], iteration_bounds = array<i64: 1>, scalar_prefetch = 0 : i64, scratch_operands = 0 : i64, tpu.core_type = #tpu.core_type<tc>, window_params = [{transform_indices = @transform_0, window_bounds = array<i64: 8, 16>}, {pipeline_mode = #tpu.pipeline_mode<synchronous>, transform_indices = @transform_1, window_bounds = array<i64: 16, 8>}, {pipeline_mode = #tpu.pipeline_mode<synchronous>, transform_indices = @transform_2, window_bounds = array<i64: 8, 32>}, {transform_indices = @transform_3, window_bounds = array<i64: 8, 32>}]} {
    %c0 = arith.constant 0 : index
    %c0_0 = arith.constant 0 : index
    %0 = vector.load %arg1[%c0, %c0_0] : memref<8x16xf32, #tpu.memory_space<vmem>>, vector<8x16xf32>
    %c0_1 = arith.constant 0 : index
    %c0_2 = arith.constant 0 : index
    %1 = vector.load %arg2[%c0_1, %c0_2] : memref<16x8xf32, #tpu.memory_space<vmem>>, vector<16x8xf32>
    %cst = arith.constant dense<0.000000e+00> : vector<8x8xf32>
    %2 = tpu.matmul %0, %1, %cst {dimension_numbers = #tpu.dot_dimension_numbers<[1], [0], [0], [1], [0, 0, 1, 1], [], []>} : vector<8x16xf32>, vector<16x8xf32>, vector<8x8xf32> -> vector<8x8xf32>
    %cst_3 = arith.constant dense<0xFF800000> : vector<8xf32>
    %3 = vector.multi_reduction <maximumf>, %2, %cst_3 [1] : vector<8x8xf32> to vector<8xf32>
    %4 = vector.shape_cast %3 : vector<8xf32> to vector<8x1xf32>
    %5 = vector.broadcast %4 : vector<8x1xf32> to vector<8x8xf32>
    %6 = arith.subf %2, %5 : vector<8x8xf32>
    %7 = math.exp %6 : vector<8x8xf32>
    %cst_4 = arith.constant dense<0.000000e+00> : vector<8xf32>
    %8 = vector.multi_reduction <add>, %7, %cst_4 [1] : vector<8x8xf32> to vector<8xf32>
    %9 = vector.shape_cast %8 : vector<8xf32> to vector<8x1xf32>
    %10 = tpu.reciprocal %9 {approx = true} : vector<8x1xf32> -> vector<8x1xf32>
    %11 = arith.mulf %9, %10 : vector<8x1xf32>
    %cst_5 = arith.constant 2.000000e+00 : f32
    %12 = vector.broadcast %cst_5 : f32 to vector<8x1xf32>
    %13 = arith.subf %12, %11 : vector<8x1xf32>
    %14 = arith.mulf %10, %13 : vector<8x1xf32>
    %15 = vector.broadcast %14 : vector<8x1xf32> to vector<8x8xf32>
    %16 = arith.mulf %7, %15 : vector<8x8xf32>
    %c0_6 = arith.constant 0 : index
    %c0_7 = arith.constant 0 : index
    %17 = vector.load %arg3[%c0_6, %c0_7] : memref<8x32xf32, #tpu.memory_space<vmem>>, vector<8x32xf32>
    %cst_8 = arith.constant dense<0.000000e+00> : vector<8x32xf32>
    %18 = tpu.matmul %16, %17, %cst_8 {dimension_numbers = #tpu.dot_dimension_numbers<[1], [0], [0], [1], [0, 0, 1, 1], [], []>} : vector<8x8xf32>, vector<8x32xf32>, vector<8x32xf32> -> vector<8x32xf32>
    %c0_9 = arith.constant 0 : index
    %c0_10 = arith.constant 0 : index
    %19 = vector.load %arg4[%c0_9, %c0_10] : memref<8x32xf32, #tpu.memory_space<vmem>>, vector<8x32xf32>
    tpu.vector_store %arg4[%c0_9, %c0_10], %18 {strides = array<i32>} : memref<8x32xf32, #tpu.memory_space<vmem>>, vector<8x32xf32>,
    return
  }
  func.func @transform_0(%arg0: i32) -> (i32, i32) {
    %c0_i32 = arith.constant 0 : i32
    %c0_i32_0 = arith.constant 0 : i32
    return %arg0, %c0_i32 : i32, i32
  }
  func.func @transform_1(%arg0: i32) -> (i32, i32) {
    %c0_i32 = arith.constant 0 : i32
    %c0_i32_0 = arith.constant 0 : i32
    %c0_i32_1 = arith.constant 0 : i32
    return %c0_i32, %c0_i32_0 : i32, i32
  }
  func.func @transform_2(%arg0: i32) -> (i32, i32) {
    %c0_i32 = arith.constant 0 : i32
    %c0_i32_0 = arith.constant 0 : i32
    %c0_i32_1 = arith.constant 0 : i32
    return %c0_i32, %c0_i32_0 : i32, i32
  }
  func.func @transform_3(%arg0: i32) -> (i32, i32) {
    %c0_i32 = arith.constant 0 : i32
    %c0_i32_0 = arith.constant 0 : i32
    return %arg0, %c0_i32 : i32, i32
  }
}

</mosaic_0001>

<llo_original>
// kernel: stl_forward.1
$region0: #{stl_forward.1}
  #allocation0 [shape = 'u32[]', space=smem, size = 0x4, offset = 0x4, fixed_abs, tag = 'smem constant byte address 0x4 - core index']
  #allocation1 [shape = 'u32[72,128]{1,0:T(1,128)}', space=vmem, size = 0x9000, scoped, tag = 'internal scratch']
  %s0 = inlined_call_operand.vmem [shape: f32[8,16], index: 0, kind: input, shape index: {}]
  %s1 = inlined_call_operand.vmem [shape: f32[16,8], index: 1, kind: input, shape index: {}]
  %s2 = inlined_call_operand.vmem [shape: f32[8,32], index: 2, kind: input, shape index: {}]
  %s3 = inlined_call_operand.vmem [shape: f32[8,32], index: 3, kind: output, shape index: {}]
  %s4 = sld [smem:[#allocation0]]
  $region22: #{stl_forward.1} parent=0
    _
  %s6 = ssub.s32 1, %s4
  %s7 = scalar_select 0, %s6, %s4
  // Predicated region
  $region2: #{stl_forward.1} parent=0 // pred_check
    _
  $region3: #{stl_forward.1} parent=0 // pred_check_branch
    %9 = sbr.rel (0) target = $region5
  $region4: #{stl_forward.1} parent=0 // pred_region
    _
  $region5: #{stl_forward.1} parent=0 // pred_fallthru
    _
  // Predicated region
  $region6: #{stl_forward.1} parent=0 // pred_check
    _
  $region7: #{stl_forward.1} parent=0 // pred_check_branch
    %11 = sbr.rel (0) target = $region9
  $region8: #{stl_forward.1} parent=0 // pred_region
    _
  $region9: #{stl_forward.1} parent=0 // pred_fallthru
    _
  // Predicated region
  $region10: #{stl_forward.1} parent=0 // pred_check
    _
  $region11: #{stl_forward.1} parent=0 // pred_check_branch
    %13 = sbr.rel (0) target = $region13
  $region12: #{stl_forward.1} parent=0 // pred_region
    _
  $region13: #{stl_forward.1} parent=0 // pred_fallthru
    _
  %v14 = vld [vmem:[%s0] sm:$0xff]
  %v15 = vld [vmem:[%s1] sm:$0xff]
  %v16 = vld [vmem:[%s1 + $0x8] sm:$0xff]
  %vm17 = vcmask 130048
  %v19 = vsel %vm17, %v14, 0
  %21 = vmatpush.msra.mxu0 0.0
  %22 = vmatpush.msra.mxu0 0.0
  %23 = vmatpush.msra.mxu0 0.0
  %24 = vmatpush.msra.mxu0 0.0
  %25 = vmatpush.msra.mxu0 0.0
  %26 = vmatpush.msra.mxu0 0.0
  %27 = vmatpush.msra.mxu0 0.0
  %28 = vmatpush.msra.mxu0 0.0
  %29 = vmatpush.msra.mxu0 0.0
  %30 = vmatpush.msra.mxu0 0.0
  %31 = vmatpush.msra.mxu0 0.0
  %32 = vmatpush.msra.mxu0 0.0
  %33 = vmatpush.msra.mxu0 0.0
  %34 = vmatpush.msra.mxu0 0.0
  %35 = vmatpush.msra.mxu0 %v16
  %36 = vmatpush.msra.mxu0 %v15
  %37 = vmatmul.f32.gmra.mxu0 %v19
  %v38 = vpop.f32.mrf.mxu0
  %v39 = vadd.f32 0.0, %v38
  %40 = vdwg.mxu0
  %vm41 = vcmask 64512
  %v42 = vsel %vm41, %v39, -inf
  %43 = vmax.xlane.f32.xlu0 %v42
  %v44 = vpop.xlane.xlu0 %43
  %v45 = vsub.f32 %v39, %v44
  %v46 = vmul.f32 %v45, 1.442695
  %v47 = vpow.pop %v46
  %v48 = vsel %vm41, %v47, 0.0
  %49 = vadd.xlane.f32.xlu0 %v48
  %v50 = vpop.xlane.xlu0 %49
  %v51 = vrcp.pop %v50
  %v52 = vmul.f32 %v50, %v51
  %v53 = vsub.f32 2.0, %v52
  %v54 = vmul.f32 %v51, %v53
  %v55 = vmul.f32 %v47, %v54
  %v56 = vld [vmem:[%s2] sm:$0xff]
  %v58 = vsel %vm41, %v55, 0
  %60 = vmatpush.msra.mxu0 0.0
  %61 = vmatpush.msra.mxu0 0.0
  %62 = vmatpush.msra.mxu0 0.0
  %63 = vmatpush.msra.mxu0 0.0
  %64 = vmatpush.msra.mxu0 0.0
  %65 = vmatpush.msra.mxu0 0.0
  %66 = vmatpush.msra.mxu0 0.0
  %67 = vmatpush.msra.mxu0 0.0
  %68 = vmatpush.msra.mxu0 0.0
  %69 = vmatpush.msra.mxu0 0.0
  %70 = vmatpush.msra.mxu0 0.0
  %71 = vmatpush.msra.mxu0 0.0
  %72 = vmatpush.msra.mxu0 0.0
  %73 = vmatpush.msra.mxu0 0.0
  %74 = vmatpush.msra.mxu0 0.0
  %75 = vmatpush.msra.mxu0 %v56
  %76 = vmatmul.f32.gmra.mxu0 %v58
  %v77 = vpop.f32.mrf.mxu0
  %v78 = vadd.f32 0.0, %v77
  %79 = vdwg.mxu0
  %vm80 = vcmask 261120
  %81 = vst.msk [vmem:[%s3] sm:$0xff] %vm80, %v78
  // Predicated region
  $region14: #{stl_forward.1} parent=0 // pred_check
    _
  $region15: #{stl_forward.1} parent=0 // pred_check_branch
    %83 = sbr.rel (0) target = $region17
  $region16: #{stl_forward.1} parent=0 // pred_region
    _
  $region17: #{stl_forward.1} parent=0 // pred_fallthru
    _
  // Predicated region
  $region18: #{stl_forward.1} parent=0 // pred_check
    _
  $region19: #{stl_forward.1} parent=0 // pred_check_branch
    %85 = sbr.rel (0) target = $region21
  $region20: #{stl_forward.1} parent=0 // pred_region
    _
  $region21: #{stl_forward.1} parent=0 // pred_fallthru
    _

</llo_original>
